<compile_context>
chip_gen: v7x
topology: tpu7x:2x2x1
jax: 0.10.0
libtpu: 0.0.40
codegen_flags: <defaults>
</compile_context>

<pallas_src>
import functools

import jax
import jax.numpy as jnp
from jax.experimental import pallas as pl
from jax.experimental.pallas import tpu as pltpu


def _mlp_kernel(x_ref, w1_ref, b1_ref, w2_ref, b2_ref, w3_ref, b3_ref, o_ref):
    # x tile: (TILE_B, 8); weights in PyTorch (out, in) layout; biases (out, 1).
    x = x_ref[...]  # already f32; no redundant cast

    # Layer 1: (6, 8) . (TILE_B, 8)^T -> (6, TILE_B). Contraction on both minor dims
    # (the q@k.T pattern) so the batch lands on lanes without an explicit transpose.
    h = jax.lax.dot_general(
        w1_ref[...], x,
        dimension_numbers=(((1,), (1,)), ((), ())),
        preferred_element_type=jnp.float32,
    ) + b1_ref[...]
    h = h / (1.0 + jnp.abs(h))  # Softsign

    # Layer 2: (4, 6) @ (6, TILE_B) -> (4, TILE_B)
    h = jnp.dot(w2_ref[...], h, preferred_element_type=jnp.float32) + b2_ref[...]
    h = h / (1.0 + jnp.abs(h))  # Softsign

    # Layer 3: (1, 4) @ (4, TILE_B) -> (1, TILE_B), Sigmoid; lane-dense store.
    h = jnp.dot(w3_ref[...], h, preferred_element_type=jnp.float32) + b3_ref[...]
    o_ref[...] = jax.nn.sigmoid(h)


def _round_up(n, m):
    return (n + m - 1) // m * m


@functools.partial(jax.jit, static_argnames=("tile_b_max",))
def linear_modle_forward(x, params, tile_b_max=8192):
    """x: (B, 8) float32 -> (B, 1) float32."""
    w1, b1, w2, b2, w3, b3 = params
    B, F = x.shape
    assert F == 8, "LinearModle expects 8 input features"

    # Large batch tiles amortize the ~0.35us/step grid overhead; 128-multiple keeps the
    # lane-dense (1, TILE_B) output block aligned to the lane width.
    tile_b = min(tile_b_max, _round_up(B, 128))
    b_pad = _round_up(B, tile_b)
    if b_pad != B:
        x = jnp.pad(x, ((0, b_pad - B), (0, 0)))
    grid = (b_pad // tile_b,)

    const = lambda i: (0, 0)  # weights/biases resident in VMEM across all grid steps
    out = pl.pallas_call(
        _mlp_kernel,
        out_shape=jax.ShapeDtypeStruct((1, b_pad), jnp.float32),
        grid=grid,
        in_specs=[
            pl.BlockSpec((tile_b, 8), lambda i: (i, 0)),  # x batch tiles
            pl.BlockSpec(w1.shape, const),
            pl.BlockSpec(b1.shape, const),
            pl.BlockSpec(w2.shape, const),
            pl.BlockSpec(b2.shape, const),
            pl.BlockSpec(w3.shape, const),
            pl.BlockSpec(b3.shape, const),
        ],
        out_specs=pl.BlockSpec((1, tile_b), lambda i: (0, i)),
        compiler_params=pltpu.CompilerParams(
            dimension_semantics=("parallel",),    # shard batch tiles across TCs on v7x
            vmem_limit_bytes=32 * 1024 * 1024,    # explicit headroom (v5e default is 16 MiB)
        ),
        cost_estimate=pl.CostEstimate(
            flops=2 * 76 * b_pad,                 # (8*6 + 6*4 + 4*1) MACs per row
            transcendentals=b_pad,                # sigmoid exp per row
            bytes_accessed=b_pad * (8 * 4 + 4),   # HBM-bound: ~36 bytes per row
        ),
    )(x, w1, b1, w2, b2, w3, b3)

    # (1, b_pad) -> (b_pad, 1) is a trivial reorder; drop the padded rows.
    return out.reshape(b_pad, 1)[:B]


def init_params(key):
    """torch.nn.Linear-style init: uniform +/- 1/sqrt(fan_in).

    Weights kept in PyTorch (out_features, in_features) layout; biases stored as
    (out_features, 1) so they broadcast over the lane (batch) axis inside the kernel.
    """
    dims = [(8, 6), (6, 4), (4, 1)]
    params = []
    for fan_in, fan_out in dims:
        key, kw, kb = jax.random.split(key, 3)
        bound = 1.0 / jnp.sqrt(float(fan_in))
        w = jax.random.uniform(kw, (fan_out, fan_in), jnp.float32, -bound, bound)
        b = jax.random.uniform(kb, (fan_out, 1), jnp.float32, -bound, bound)
        params += [w, b]
    return tuple(params)


if __name__ == "__main__":
    key = jax.random.PRNGKey(0)
    key, kx = jax.random.split(key)

    batch = 8
    x = jax.random.normal(kx, (batch, 8), jnp.float32)
    params = init_params(key)

    out = linear_modle_forward(x, params)
    jax.block_until_ready(out)

    # Pure-JAX reference (same math, outside Pallas).
    w1, b1, w2, b2, w3, b3 = params
    h = x @ w1.T + b1[:, 0]
    h = h / (1.0 + jnp.abs(h))
    h = h @ w2.T + b2[:, 0]
    h = h / (1.0 + jnp.abs(h))
    ref = jax.nn.sigmoid(h @ w3.T + b3[:, 0])

    assert out.shape == (batch, 1)
    assert jnp.allclose(out, ref, atol=1e-5), "mismatch vs reference"

    print("KERNEL_OK")
</pallas_src>

<mosaic_0001>
module attributes {stable_mosaic.version = 11 : i64} {
  func.func @_mlp_kernel(%arg0: i32, %arg1: memref<128x8xf32, #tpu.memory_space<vmem>>, %arg2: memref<6x8xf32, #tpu.memory_space<vmem>>, %arg3: memref<6x1xf32, #tpu.memory_space<vmem>>, %arg4: memref<4x6xf32, #tpu.memory_space<vmem>>, %arg5: memref<4x1xf32, #tpu.memory_space<vmem>>, %arg6: memref<1x4xf32, #tpu.memory_space<vmem>>, %arg7: memref<1x1xf32, #tpu.memory_space<vmem>>, %arg8: memref<1x128xf32, #tpu.memory_space<vmem>>) attributes {dimension_semantics = [#tpu.dimension_semantics<parallel>], iteration_bounds = array<i64: 1>, scalar_prefetch = 0 : i64, scratch_operands = 0 : i64, tpu.core_type = #tpu.core_type<tc>, window_params = [{transform_indices = @transform_0, window_bounds = array<i64: 128, 8>}, {pipeline_mode = #tpu.pipeline_mode<synchronous>, transform_indices = @transform_1, window_bounds = array<i64: 6, 8>}, {pipeline_mode = #tpu.pipeline_mode<synchronous>, transform_indices = @transform_2, window_bounds = array<i64: 6, 1>}, {pipeline_mode = #tpu.pipeline_mode<synchronous>, transform_indices = @transform_3, window_bounds = array<i64: 4, 6>}, {pipeline_mode = #tpu.pipeline_mode<synchronous>, transform_indices = @transform_4, window_bounds = array<i64: 4, 1>}, {pipeline_mode = #tpu.pipeline_mode<synchronous>, transform_indices = @transform_5, window_bounds = array<i64: 1, 4>}, {pipeline_mode = #tpu.pipeline_mode<synchronous>, transform_indices = @transform_6, window_bounds = array<i64: 1, 1>}, {transform_indices = @transform_7, window_bounds = array<i64: 1, 128>}]} {
    %c0 = arith.constant 0 : index
    %c0_0 = arith.constant 0 : index
    %0 = vector.load %arg1[%c0, %c0_0] : memref<128x8xf32, #tpu.memory_space<vmem>>, vector<128x8xf32>
    %c0_1 = arith.constant 0 : index
    %c0_2 = arith.constant 0 : index
    %1 = vector.load %arg2[%c0_1, %c0_2] : memref<6x8xf32, #tpu.memory_space<vmem>>, vector<6x8xf32>
    %cst = arith.constant dense<0.000000e+00> : vector<6x128xf32>
    %2 = tpu.matmul %1, %0, %cst {dimension_numbers = #tpu.dot_dimension_numbers<[1], [1], [0], [0], [0, 0, 1, 0], [], []>} : vector<6x8xf32>, vector<128x8xf32>, vector<6x128xf32> -> vector<6x128xf32>
    %c0_3 = arith.constant 0 : index
    %c0_4 = arith.constant 0 : index
    %3 = vector.load %arg3[%c0_3, %c0_4] : memref<6x1xf32, #tpu.memory_space<vmem>>, vector<6x1xf32>
    %4 = vector.broadcast %3 : vector<6x1xf32> to vector<6x128xf32>
    %5 = arith.addf %2, %4 : vector<6x128xf32>
    %6 = math.absf %5 : vector<6x128xf32>
    %cst_5 = arith.constant 1.000000e+00 : f32
    %7 = vector.broadcast %cst_5 : f32 to vector<6x128xf32>
    %8 = arith.addf %7, %6 : vector<6x128xf32>
    %9 = arith.divf %5, %8 : vector<6x128xf32>
    %c0_6 = arith.constant 0 : index
    %c0_7 = arith.constant 0 : index
    %10 = vector.load %arg4[%c0_6, %c0_7] : memref<4x6xf32, #tpu.memory_space<vmem>>, vector<4x6xf32>
    %cst_8 = arith.constant dense<0.000000e+00> : vector<4x128xf32>
    %11 = tpu.matmul %10, %9, %cst_8 {dimension_numbers = #tpu.dot_dimension_numbers<[1], [0], [0], [1], [0, 0, 1, 1], [], []>} : vector<4x6xf32>, vector<6x128xf32>, vector<4x128xf32> -> vector<4x128xf32>
    %c0_9 = arith.constant 0 : index
    %c0_10 = arith.constant 0 : index
    %12 = vector.load %arg5[%c0_9, %c0_10] : memref<4x1xf32, #tpu.memory_space<vmem>>, vector<4x1xf32>
    %13 = vector.broadcast %12 : vector<4x1xf32> to vector<4x128xf32>
    %14 = arith.addf %11, %13 : vector<4x128xf32>
    %15 = math.absf %14 : vector<4x128xf32>
    %cst_11 = arith.constant 1.000000e+00 : f32
    %16 = vector.broadcast %cst_11 : f32 to vector<4x128xf32>
    %17 = arith.addf %16, %15 : vector<4x128xf32>
    %18 = arith.divf %14, %17 : vector<4x128xf32>
    %c0_12 = arith.constant 0 : index
    %c0_13 = arith.constant 0 : index
    %19 = vector.load %arg6[%c0_12, %c0_13] : memref<1x4xf32, #tpu.memory_space<vmem>>, vector<1x4xf32>
    %cst_14 = arith.constant dense<0.000000e+00> : vector<1x128xf32>
    %20 = tpu.matmul %19, %18, %cst_14 {dimension_numbers = #tpu.dot_dimension_numbers<[1], [0], [0], [1], [0, 0, 1, 1], [], []>} : vector<1x4xf32>, vector<4x128xf32>, vector<1x128xf32> -> vector<1x128xf32>
    %c0_15 = arith.constant 0 : index
    %c0_16 = arith.constant 0 : index
    %21 = vector.load %arg7[%c0_15, %c0_16] : memref<1x1xf32, #tpu.memory_space<vmem>>, vector<1x1xf32>
    %22 = vector.broadcast %21 : vector<1x1xf32> to vector<1x128xf32>
    %23 = arith.addf %20, %22 : vector<1x128xf32>
    %24 = arith.negf %23 : vector<1x128xf32>
    %25 = math.exp %24 : vector<1x128xf32>
    %cst_17 = arith.constant 1.000000e+00 : f32
    %26 = vector.broadcast %cst_17 : f32 to vector<1x128xf32>
    %27 = arith.addf %26, %25 : vector<1x128xf32>
    %28 = arith.divf %26, %27 : vector<1x128xf32>
    %c0_18 = arith.constant 0 : index
    %c0_19 = arith.constant 0 : index
    %29 = vector.load %arg8[%c0_18, %c0_19] : memref<1x128xf32, #tpu.memory_space<vmem>>, vector<1x128xf32>
    tpu.vector_store %arg8[%c0_18, %c0_19], %28 {strides = array<i32>} : memref<1x128xf32, #tpu.memory_space<vmem>>, vector<1x128xf32>,
    return
  }
  func.func @transform_0(%arg0: i32) -> (i32, i32) {
    %c0_i32 = arith.constant 0 : i32
    %c0_i32_0 = arith.constant 0 : i32
    return %arg0, %c0_i32 : i32, i32
  }
  func.func @transform_1(%arg0: i32) -> (i32, i32) {
    %c0_i32 = arith.constant 0 : i32
    %c0_i32_0 = arith.constant 0 : i32
    %c0_i32_1 = arith.constant 0 : i32
    return %c0_i32, %c0_i32_0 : i32, i32
  }
  func.func @transform_2(%arg0: i32) -> (i32, i32) {
    %c0_i32 = arith.constant 0 : i32
    %c0_i32_0 = arith.constant 0 : i32
    %c0_i32_1 = arith.constant 0 : i32
    return %c0_i32, %c0_i32_0 : i32, i32
  }
  func.func @transform_3(%arg0: i32) -> (i32, i32) {
    %c0_i32 = arith.constant 0 : i32
    %c0_i32_0 = arith.constant 0 : i32
    %c0_i32_1 = arith.constant 0 : i32
    return %c0_i32, %c0_i32_0 : i32, i32
  }
  func.func @transform_4(%arg0: i32) -> (i32, i32) {
    %c0_i32 = arith.constant 0 : i32
    %c0_i32_0 = arith.constant 0 : i32
    %c0_i32_1 = arith.constant 0 : i32
    return %c0_i32, %c0_i32_0 : i32, i32
  }
  func.func @transform_5(%arg0: i32) -> (i32, i32) {
    %c0_i32 = arith.constant 0 : i32
    %c0_i32_0 = arith.constant 0 : i32
    %c0_i32_1 = arith.constant 0 : i32
    return %c0_i32, %c0_i32_0 : i32, i32
  }
  func.func @transform_6(%arg0: i32) -> (i32, i32) {
    %c0_i32 = arith.constant 0 : i32
    %c0_i32_0 = arith.constant 0 : i32
    %c0_i32_1 = arith.constant 0 : i32
    return %c0_i32, %c0_i32_0 : i32, i32
  }
  func.func @transform_7(%arg0: i32) -> (i32, i32) {
    %c0_i32 = arith.constant 0 : i32
    %c0_i32_0 = arith.constant 0 : i32
    return %c0_i32, %arg0 : i32, i32
  }
}

</mosaic_0001>

<llo_original>
// kernel: linear_modle_forward.1
$region0: #{linear_modle_forward.1}
  #allocation0 [shape = 'u32[]', space=smem, size = 0x4, offset = 0x4, fixed_abs, tag = 'smem constant byte address 0x4 - core index']
  #allocation1 [shape = 'u32[144,128]{1,0:T(1,128)}', space=vmem, size = 0x12000, scoped, tag = 'internal scratch']
  #allocation2 [shape = 'f32[1,1]{1,0:T(1,128)S(1)}', space=vmem, size = 0x200, scoped, tag = 'scoped memory for linear_modle_forward.1']
  %s0 = inlined_call_operand.vmem [shape: f32[128,8], index: 0, kind: input, shape index: {}]
  %s1 = inlined_call_operand.vmem [shape: f32[6,8], index: 1, kind: input, shape index: {}]
  %s2 = inlined_call_operand.vmem [shape: f32[6,1], index: 2, kind: input, shape index: {}]
  %s3 = inlined_call_operand.vmem [shape: f32[4,6], index: 3, kind: input, shape index: {}]
  %s4 = inlined_call_operand.vmem [shape: f32[4,1], index: 4, kind: input, shape index: {}]
  %s5 = inlined_call_operand.vmem [shape: f32[1,4], index: 5, kind: input, shape index: {}]
  %s6 = inlined_call_operand.<no memory space> [shape: f32[1,1], index: 6, kind: input, shape index: {}]
  %s7 = inlined_call_operand.vmem [shape: f32[1,128], index: 7, kind: output, shape index: {}]
  %s8 = sld [smem:[#allocation0]]
  $region38: #{linear_modle_forward.1} parent=0
    _
  %s10 = ssub.s32 1, %s8
  %s11 = scalar_select 0, %s10, %s8
  %v12 = vstv %s6
  %13 = vst [vmem:[#allocation2] sm:$0x1] %v12
  // Predicated region
  $region2: #{linear_modle_forward.1} parent=0 // pred_check
    _
  $region3: #{linear_modle_forward.1} parent=0 // pred_check_branch
    %15 = sbr.rel (0) target = $region5
  $region4: #{linear_modle_forward.1} parent=0 // pred_region
    _
  $region5: #{linear_modle_forward.1} parent=0 // pred_fallthru
    _
  // Predicated region
  $region6: #{linear_modle_forward.1} parent=0 // pred_check
    _
  $region7: #{linear_modle_forward.1} parent=0 // pred_check_branch
    %17 = sbr.rel (0) target = $region9
  $region8: #{linear_modle_forward.1} parent=0 // pred_region
    _
  $region9: #{linear_modle_forward.1} parent=0 // pred_fallthru
    _
  // Predicated region
  $region10: #{linear_modle_forward.1} parent=0 // pred_check
    _
  $region11: #{linear_modle_forward.1} parent=0 // pred_check_branch
    %19 = sbr.rel (0) target = $region13
  $region12: #{linear_modle_forward.1} parent=0 // pred_region
    _
  $region13: #{linear_modle_forward.1} parent=0 // pred_fallthru
    _
  // Predicated region
  $region14: #{linear_modle_forward.1} parent=0 // pred_check
    _
  $region15: #{linear_modle_forward.1} parent=0 // pred_check_branch
    %21 = sbr.rel (0) target = $region17
  $region16: #{linear_modle_forward.1} parent=0 // pred_region
    _
  $region17: #{linear_modle_forward.1} parent=0 // pred_fallthru
    _
  // Predicated region
  $region18: #{linear_modle_forward.1} parent=0 // pred_check
    _
  $region19: #{linear_modle_forward.1} parent=0 // pred_check_branch
    %23 = sbr.rel (0) target = $region21
  $region20: #{linear_modle_forward.1} parent=0 // pred_region
    _
  $region21: #{linear_modle_forward.1} parent=0 // pred_fallthru
    _
  // Predicated region
  $region22: #{linear_modle_forward.1} parent=0 // pred_check
    _
  $region23: #{linear_modle_forward.1} parent=0 // pred_check_branch
    %25 = sbr.rel (0) target = $region25
  $region24: #{linear_modle_forward.1} parent=0 // pred_region
    _
  $region25: #{linear_modle_forward.1} parent=0 // pred_fallthru
    _
  // Predicated region
  $region26: #{linear_modle_forward.1} parent=0 // pred_check
    _
  $region27: #{linear_modle_forward.1} parent=0 // pred_check_branch
    %27 = sbr.rel (0) target = $region29
  $region28: #{linear_modle_forward.1} parent=0 // pred_region
    _
  $region29: #{linear_modle_forward.1} parent=0 // pred_fallthru
    _
  %v28 = vld [vmem:[%s0] sm:$0xff]
  %v29 = vld [vmem:[%s0 + $0x8] sm:$0xff]
  %v30 = vld [vmem:[%s0 + $0x10] sm:$0xff]
  %v31 = vld [vmem:[%s0 + $0x18] sm:$0xff]
  %v32 = vld [vmem:[%s0 + $0x20] sm:$0xff]
  %v33 = vld [vmem:[%s0 + $0x28] sm:$0xff]
  %v34 = vld [vmem:[%s0 + $0x30] sm:$0xff]
  %v35 = vld [vmem:[%s0 + $0x38] sm:$0xff]
  %v36 = vld [vmem:[%s0 + $0x40] sm:$0xff]
  %v37 = vld [vmem:[%s0 + $0x48] sm:$0xff]
  %v38 = vld [vmem:[%s0 + $0x50] sm:$0xff]
  %v39 = vld [vmem:[%s0 + $0x58] sm:$0xff]
  %v40 = vld [vmem:[%s0 + $0x60] sm:$0xff]
  %v41 = vld [vmem:[%s0 + $0x68] sm:$0xff]
  %v42 = vld [vmem:[%s0 + $0x70] sm:$0xff]
  %v43 = vld [vmem:[%s0 + $0x78] sm:$0xff]
  %v44 = vld [vmem:[%s1] sm:$0x3f]
  %v45 = vld [vmem:[%s2] sm:$0x3f]
  %47 = vset.pattern.permute.xlu0 0
  %48 = vperm.xlu0 %47, %v45
  %v49 = vpop.permute.xlu0 %48
  %vm51 = vcmask 64512
  %v53 = vsel %vm51, %v44, 0
  %v56 = vsel %vm51, %v28, 0
  %v59 = vsel %vm51, %v29, 0
  %v62 = vsel %vm51, %v30, 0
  %v65 = vsel %vm51, %v31, 0
  %v68 = vsel %vm51, %v32, 0
  %v71 = vsel %vm51, %v33, 0
  %v74 = vsel %vm51, %v34, 0
  %v77 = vsel %vm51, %v35, 0
  %v80 = vsel %vm51, %v36, 0
  %v83 = vsel %vm51, %v37, 0
  %v86 = vsel %vm51, %v38, 0
  %v89 = vsel %vm51, %v39, 0
  %v92 = vsel %vm51, %v40, 0
  %v95 = vsel %vm51, %v41, 0
  %v98 = vsel %vm51, %v42, 0
  %v101 = vsel %vm51, %v43, 0
  %103 = vmatprep.subr.mxu0 0.0
  %104 = vmatpush1.xpose.msra.mxu0 %v56
  %105 = vmatprep.subr.mxu0 0.0
  %106 = vmatpush1.xpose.msra.mxu0 %v59
  %107 = vmatprep.subr.mxu0 0.0
  %108 = vmatpush1.xpose.msra.mxu0 %v62
  %109 = vmatprep.subr.mxu0 0.0
  %110 = vmatpush1.xpose.msra.mxu0 %v65
  %111 = vmatprep.subr.mxu0 0.0
  %112 = vmatpush1.xpose.msra.mxu0 %v68
  %113 = vmatprep.subr.mxu0 0.0
  %114 = vmatpush1.xpose.msra.mxu0 %v71
  %115 = vmatprep.subr.mxu0 0.0
  %116 = vmatpush1.xpose.msra.mxu0 %v74
  %117 = vmatprep.subr.mxu0 0.0
  %118 = vmatpush1.xpose.msra.mxu0 %v77
  %119 = vmatprep.subr.mxu0 0.0
  %120 = vmatpush1.xpose.msra.mxu0 %v80
  %121 = vmatprep.subr.mxu0 0.0
  %122 = vmatpush1.xpose.msra.mxu0 %v83
  %123 = vmatprep.subr.mxu0 0.0
  %124 = vmatpush1.xpose.msra.mxu0 %v86
  %125 = vmatprep.subr.mxu0 0.0
  %126 = vmatpush1.xpose.msra.mxu0 %v89
  %127 = vmatprep.subr.mxu0 0.0
  %128 = vmatpush1.xpose.msra.mxu0 %v92
  %129 = vmatprep.subr.mxu0 0.0
  %130 = vmatpush1.xpose.msra.mxu0 %v95
  %131 = vmatprep.subr.mxu0 0.0
  %132 = vmatpush1.xpose.msra.mxu0 %v98
  %133 = vmatprep.subr.mxu0 0.0
  %134 = vmatpush1.xpose.msra.mxu0 %v101
  %135 = vmatprep.subr.mxu0 0.0
  %136 = vmatpush1.xpose.msra.mxu0 0.0
  %137 = vmatprep.subr.mxu0 0.0
  %138 = vmatpush1.xpose.msra.mxu0 0.0
  %139 = vmatprep.subr.mxu0 0.0
  %140 = vmatpush1.xpose.msra.mxu0 0.0
  %141 = vmatprep.subr.mxu0 0.0
  %142 = vmatpush1.xpose.msra.mxu0 0.0
  %143 = vmatprep.subr.mxu0 0.0
  %144 = vmatpush1.xpose.msra.mxu0 0.0
  %145 = vmatprep.subr.mxu0 0.0
  %146 = vmatpush1.xpose.msra.mxu0 0.0
  %147 = vmatprep.subr.mxu0 0.0
  %148 = vmatpush1.xpose.msra.mxu0 0.0
  %149 = vmatprep.subr.mxu0 0.0
  %150 = vmatpush1.xpose.msra.mxu0 0.0
  %151 = vmatprep.subr.mxu0 0.0
  %152 = vmatpush1.xpose.msra.mxu0 0.0
  %153 = vmatprep.subr.mxu0 0.0
  %154 = vmatpush1.xpose.msra.mxu0 0.0
  %155 = vmatprep.subr.mxu0 0.0
  %156 = vmatpush1.xpose.msra.mxu0 0.0
  %157 = vmatprep.subr.mxu0 0.0
  %158 = vmatpush1.xpose.msra.mxu0 0.0
  %159 = vmatprep.subr.mxu0 0.0
  %160 = vmatpush1.xpose.msra.mxu0 0.0
  %161 = vmatprep.subr.mxu0 0.0
  %162 = vmatpush1.xpose.msra.mxu0 0.0
  %163 = vmatprep.subr.mxu0 0.0
  %164 = vmatpush1.xpose.msra.mxu0 0.0
  %165 = vmatprep.subr.mxu0 0.0
  %166 = vmatpush1.xpose.msra.mxu0 0.0
  %167 = vmatprep.mubr.f32.mxu0 0.0
  %168 = vmatmul.mubr.f32.gmra.mrb[0].mxu0 %v53
  %v169 = vpop.f32.mrb[0].mxu0
  %v170 = vadd.f32 %v49, %v169
  %v171 = vpop.f32.mrb[0].mxu0
  %172 = vdwg.mxu0
  %v173 = vand.u32 2147483647, %v170
  %v174 = vadd.f32 %v173, 1.0
  %v175 = vrcp.pop %v174
  %v176 = vmul.f32 %v170, %v175
  %v177 = vld [vmem:[%s3] sm:$0xf]
  %v178 = vld [vmem:[%s4] sm:$0xf]
  %180 = vset.pattern.permute.xlu0 0
  %181 = vperm.xlu0 %180, %v178
  %v182 = vpop.permute.xlu0 %181
  %vm184 = vcmask 48128
  %v186 = vsel %vm184, %v177, 0
  %vm188 = vcmask 1045504
  %v190 = vsel %vm188, %v176, 0
  %192 = vmatprep.subr.mxu0 0.0
  %193 = vmatpush1.msra.mxu0 %v190
  %194 = vmatprep.subr.mxu0 0.0
  %195 = vmatpush1.msra.mxu0 0.0
  %196 = vmatprep.subr.mxu0 0.0
  %197 = vmatpush1.msra.mxu0 0.0
  %198 = vmatprep.subr.mxu0 0.0
  %199 = vmatpush1.msra.mxu0 0.0
  %200 = vmatprep.subr.mxu0 0.0
  %201 = vmatpush1.msra.mxu0 0.0
  %202 = vmatprep.subr.mxu0 0.0
  %203 = vmatpush1.msra.mxu0 0.0
  %204 = vmatprep.subr.mxu0 0.0
  %205 = vmatpush1.msra.mxu0 0.0
  %206 = vmatprep.subr.mxu0 0.0
  %207 = vmatpush1.msra.mxu0 0.0
  %208 = vmatprep.subr.mxu0 0.0
  %209 = vmatpush1.msra.mxu0 0.0
  %210 = vmatprep.subr.mxu0 0.0
  %211 = vmatpush1.msra.mxu0 0.0
  %212 = vmatprep.subr.mxu0 0.0
  %213 = vmatpush1.msra.mxu0 0.0
  %214 = vmatprep.subr.mxu0 0.0
  %215 = vmatpush1.msra.mxu0 0.0
  %216 = vmatprep.subr.mxu0 0.0
  %217 = vmatpush1.msra.mxu0 0.0
  %218 = vmatprep.subr.mxu0 0.0
  %219 = vmatpush1.msra.mxu0 0.0
  %220 = vmatprep.subr.mxu0 0.0
  %221 = vmatpush1.msra.mxu0 0.0
  %222 = vmatprep.subr.mxu0 0.0
  %223 = vmatpush1.msra.mxu0 0.0
  %224 = vmatprep.subr.mxu0 0.0
  %225 = vmatpush1.msra.mxu0 0.0
  %226 = vmatprep.subr.mxu0 0.0
  %227 = vmatpush1.msra.mxu0 0.0
  %228 = vmatprep.subr.mxu0 0.0
  %229 = vmatpush1.msra.mxu0 0.0
  %230 = vmatprep.subr.mxu0 0.0
  %231 = vmatpush1.msra.mxu0 0.0
  %232 = vmatprep.subr.mxu0 0.0
  %233 = vmatpush1.msra.mxu0 0.0
  %234 = vmatprep.subr.mxu0 0.0
  %235 = vmatpush1.msra.mxu0 0.0
  %236 = vmatprep.subr.mxu0 0.0
  %237 = vmatpush1.msra.mxu0 0.0
  %238 = vmatprep.subr.mxu0 0.0
  %239 = vmatpush1.msra.mxu0 0.0
  %240 = vmatprep.subr.mxu0 0.0
  %241 = vmatpush1.msra.mxu0 0.0
  %242 = vmatprep.subr.mxu0 0.0
  %243 = vmatpush1.msra.mxu0 0.0
  %244 = vmatprep.subr.mxu0 0.0
  %245 = vmatpush1.msra.mxu0 0.0
  %246 = vmatprep.subr.mxu0 0.0
  %247 = vmatpush1.msra.mxu0 0.0
  %248 = vmatprep.subr.mxu0 0.0
  %249 = vmatpush1.msra.mxu0 0.0
  %250 = vmatprep.subr.mxu0 0.0
  %251 = vmatpush1.msra.mxu0 0.0
  %252 = vmatprep.subr.mxu0 0.0
  %253 = vmatpush1.msra.mxu0 0.0
  %254 = vmatprep.subr.mxu0 0.0
  %255 = vmatpush1.msra.mxu0 0.0
  %256 = vmatprep.mubr.f32.mxu0 0.0
  %257 = vmatmul.mubr.f32.gmra.mrb[0].mxu0 %v186
  %v258 = vpop.f32.mrb[0].mxu0
  %v259 = vadd.f32 %v182, %v258
  %v260 = vpop.f32.mrb[0].mxu0
  %261 = vdwg.mxu0
  %v262 = vand.u32 2147483647, %v259
  %v263 = vadd.f32 %v262, 1.0
  %v264 = vrcp.pop %v263
  %v265 = vmul.f32 %v259, %v264
  %v266 = vld [vmem:[%s5] sm:$0x1]
  %v267 = vld [vmem:[#allocation2] sm:$0x1]
  %269 = vset.pattern.permute.xlu0 0
  %270 = vperm.xlu0 %269, %v267
  %v271 = vpop.permute.xlu0 %270
  %v273 = vlaneseq
  %v274 = vshrl.u32 %v273, 7
  %v275 = vsub.s32 0, %v274
  %v276 = vrot.slane %v271, %v275
  %vm277 = vcmask 31744
  %v279 = vsel %vm277, %v266, 0
  %vm281 = vcmask 1043456
  %v283 = vsel %vm281, %v265, 0
  %285 = vmatprep.subr.mxu0 0.0
  %286 = vmatpush1.msra.mxu0 %v283
  %287 = vmatprep.subr.mxu0 0.0
  %288 = vmatpush1.msra.mxu0 0.0
  %289 = vmatprep.subr.mxu0 0.0
  %290 = vmatpush1.msra.mxu0 0.0
  %291 = vmatprep.subr.mxu0 0.0
  %292 = vmatpush1.msra.mxu0 0.0
  %293 = vmatprep.subr.mxu0 0.0
  %294 = vmatpush1.msra.mxu0 0.0
  %295 = vmatprep.subr.mxu0 0.0
  %296 = vmatpush1.msra.mxu0 0.0
  %297 = vmatprep.subr.mxu0 0.0
  %298 = vmatpush1.msra.mxu0 0.0
  %299 = vmatprep.subr.mxu0 0.0
  %300 = vmatpush1.msra.mxu0 0.0
  %301 = vmatprep.subr.mxu0 0.0
  %302 = vmatpush1.msra.mxu0 0.0
  %303 = vmatprep.subr.mxu0 0.0
  %304 = vmatpush1.msra.mxu0 0.0
  %305 = vmatprep.subr.mxu0 0.0
  %306 = vmatpush1.msra.mxu0 0.0
  %307 = vmatprep.subr.mxu0 0.0
  %308 = vmatpush1.msra.mxu0 0.0
  %309 = vmatprep.subr.mxu0 0.0
  %310 = vmatpush1.msra.mxu0 0.0
  %311 = vmatprep.subr.mxu0 0.0
  %312 = vmatpush1.msra.mxu0 0.0
  %313 = vmatprep.subr.mxu0 0.0
  %314 = vmatpush1.msra.mxu0 0.0
  %315 = vmatprep.subr.mxu0 0.0
  %316 = vmatpush1.msra.mxu0 0.0
  %317 = vmatprep.subr.mxu0 0.0
  %318 = vmatpush1.msra.mxu0 0.0
  %319 = vmatprep.subr.mxu0 0.0
  %320 = vmatpush1.msra.mxu0 0.0
  %321 = vmatprep.subr.mxu0 0.0
  %322 = vmatpush1.msra.mxu0 0.0
  %323 = vmatprep.subr.mxu0 0.0
  %324 = vmatpush1.msra.mxu0 0.0
  %325 = vmatprep.subr.mxu0 0.0
  %326 = vmatpush1.msra.mxu0 0.0
  %327 = vmatprep.subr.mxu0 0.0
  %328 = vmatpush1.msra.mxu0 0.0
  %329 = vmatprep.subr.mxu0 0.0
  %330 = vmatpush1.msra.mxu0 0.0
  %331 = vmatprep.subr.mxu0 0.0
  %332 = vmatpush1.msra.mxu0 0.0
  %333 = vmatprep.subr.mxu0 0.0
  %334 = vmatpush1.msra.mxu0 0.0
  %335 = vmatprep.subr.mxu0 0.0
  %336 = vmatpush1.msra.mxu0 0.0
  %337 = vmatprep.subr.mxu0 0.0
  %338 = vmatpush1.msra.mxu0 0.0
  %339 = vmatprep.subr.mxu0 0.0
  %340 = vmatpush1.msra.mxu0 0.0
  %341 = vmatprep.subr.mxu0 0.0
  %342 = vmatpush1.msra.mxu0 0.0
  %343 = vmatprep.subr.mxu0 0.0
  %344 = vmatpush1.msra.mxu0 0.0
  %345 = vmatprep.subr.mxu0 0.0
  %346 = vmatpush1.msra.mxu0 0.0
  %347 = vmatprep.subr.mxu0 0.0
  %348 = vmatpush1.msra.mxu0 0.0
  %349 = vmatprep.mubr.f32.mxu0 0.0
  %350 = vmatmul.mubr.f32.gmra.mrb[0].mxu0 %v279
  %v351 = vpop.f32.mrb[0].mxu0
  %v352 = vadd.f32 %v276, %v351
  %v353 = vpop.f32.mrb[0].mxu0
  %354 = vdwg.mxu0
  %v355 = vxor.u32 %v352, 2147483648
  %v356 = vmul.f32 %v355, 1.442695
  %v357 = vpow.pop %v356
  %v358 = vadd.f32 %v357, 1.0
  %v359 = vrcp.pop %v358
  %v360 = vmul.f32 1.0, %v359
  %361 = vst [vmem:[%s7] sm:$0x1] %v360
  // Predicated region
  $region30: #{linear_modle_forward.1} parent=0 // pred_check
    _
  $region31: #{linear_modle_forward.1} parent=0 // pred_check_branch
    %363 = sbr.rel (0) target = $region33
  $region32: #{linear_modle_forward.1} parent=0 // pred_region
    _
  $region33: #{linear_modle_forward.1} parent=0 // pred_fallthru
    _
  // Predicated region
  $region34: #{linear_modle_forward.1} parent=0 // pred_check
    _
  $region35: #{linear_modle_forward.1} parent=0 // pred_check_branch
    %365 = sbr.rel (0) target = $region37
  $region36: #{linear_modle_forward.1} parent=0 // pred_region
    _
  $region37: #{linear_modle_forward.1} parent=0 // pred_fallthru
    _

</llo_original>
